<compile_context>
chip_gen: v6e
topology: v6e:2x2x1
jax: 0.10.0
libtpu: 0.0.40
codegen_flags: <defaults>
</compile_context>

<pallas_src>
import numpy as np
import jax
import jax.numpy as jnp
from jax.experimental import pallas as pl
from jax.experimental.pallas import tpu as pltpu


_TARGET_BLOCK_BYTES = 4 << 20          # ~4 MiB per operand block (HBM-streaming sweet spot)
_VMEM_LIMIT_BYTES = 32 * 1024 * 1024   # covers v5e's 16 MiB scoped default; fits v7x physical
_FALLBACK_CHUNK_BYTES = 256 * 1024     # logical bytes per lane-chunk in the unaligned fallback


def _glu_kernel(a_ref, b_ref, o_ref):
    # Upcast to f32: free for an HBM-bound kernel, matches an f32-accumulating
    # reference for low-precision inputs.  sigmoid's exp goes to the EUP slot.
    a = a_ref[...].astype(jnp.float32)
    b = b_ref[...].astype(jnp.float32)
    o_ref[...] = (a * jax.nn.sigmoid(b)).astype(o_ref.dtype)


def _sublane(dtype) -> int:
    isz = jnp.dtype(dtype).itemsize
    return {1: 32, 2: 16, 4: 8}.get(isz, 8)


def _round_up(x: int, m: int) -> int:
    return ((x + m - 1) // m) * m


def _largest_divisor(extent: int, multiple: int, cap: int):
    """Largest divisor of `extent` that is a multiple of `multiple` and <= cap (or None)."""
    cap = min(extent, cap)
    t = (cap // multiple) * multiple
    while t >= multiple:
        if extent % t == 0:
            return t
        t -= multiple
    return None


def _compiler_params(n_axes: int):
    return pltpu.CompilerParams(
        dimension_semantics=("parallel",) * n_axes,   # pure elementwise, no reduction
        vmem_limit_bytes=_VMEM_LIMIT_BYTES,
    )


def _cost(n_out: int, isz: int):
    return pl.CostEstimate(flops=4 * n_out, transcendentals=n_out,
                           bytes_accessed=3 * n_out * isz)


# ----------------------------------------------------------------------------
# Path 1: pre >= sublane count, HP % 128 == 0.
# 2-D view (pre, 2*HP); the b half is the same array with a +HP/tn block offset
# on the lane axis (no pre-kernel slice / copy ever materializes).
# ----------------------------------------------------------------------------
def _glu_2d(x2, pre: int, HP: int, dtype):
    isz = jnp.dtype(dtype).itemsize
    sub = _sublane(dtype)

    # Lane tile: largest 128-multiple divisor of HP that keeps an `sub`-row
    # block within the byte budget.  Guaranteed to exist since HP % 128 == 0.
    tn_cap = max(128, (_TARGET_BLOCK_BYTES // (isz * sub)) // 128 * 128)
    tn = _largest_divisor(HP, 128, tn_cap)

    # Row tile: fixed multiple of `sub`; ragged last block handled by the cdiv
    # grid (no exact-divisor requirement on `pre`).
    tm = max(sub, (_TARGET_BLOCK_BYTES // (isz * tn)) // sub * sub)
    tm = min(tm, _round_up(pre, sub))

    hp_blocks = HP // tn
    grid = (pl.cdiv(pre, tm), hp_blocks)

    # Keep >= 2 steps on a parallel axis when the tensor is big enough
    # (v7x has 2 TensorCores per chip; neutral on v5e/v6e).
    if grid == (1, 1) and pre * HP * isz >= (1 << 20):
        tn2 = _largest_divisor(HP, 128, HP // 2)
        if tn2 is not None:
            tn = tn2
            hp_blocks = HP // tn
        elif pre > sub:
            tm = min(_round_up(pre, sub), max(sub, _round_up(pl.cdiv(pre, 2), sub)))
        grid = (pl.cdiv(pre, tm), hp_blocks)

    out2 = pl.pallas_call(
        _glu_kernel,
        out_shape=jax.ShapeDtypeStruct((pre, HP), dtype),
        grid_spec=pltpu.PrefetchScalarGridSpec(
            num_scalar_prefetch=0,
            grid=grid,
            in_specs=[
                # "a" half: columns [0, HP)
                pl.BlockSpec((tm, tn), lambda i, j: (i, j)),
                # "b" half: same array, columns [HP, 2*HP)
                pl.BlockSpec((tm, tn), lambda i, j: (i, j + hp_blocks)),
            ],
            out_specs=pl.BlockSpec((tm, tn), lambda i, j: (i, j)),
        ),
        compiler_params=_compiler_params(2),
        cost_estimate=_cost(pre * HP, isz),
    )(x2, x2)
    return out2


# ----------------------------------------------------------------------------
# Path 2: pre < sublane count, HP % 128 == 0.
# 4-D view (pre, 2, HP/128, 128); the a/b half is selected by the index_map on
# the squeezed half-axis, and tiling happens on the sublane-dense (rows, 128)
# trailing dims so vregs are fully packed even for tiny `pre`.
# ----------------------------------------------------------------------------
def _glu_4d_small_pre(x, pre: int, HP: int, dtype):
    isz = jnp.dtype(dtype).itemsize
    L = 128
    rows = HP // L
    x4 = x.reshape(pre, 2, rows, L)            # free contiguous reshape

    if rows >= 8:
        tr = max(8, (_TARGET_BLOCK_BYTES // (isz * pre * L)) // 8 * 8)
        tr = min(tr, _round_up(rows, 8))
    else:
        tr = rows                              # full (small) extent is allowed
    grid = (pl.cdiv(rows, tr),)

    out3 = pl.pallas_call(
        _glu_kernel,
        out_shape=jax.ShapeDtypeStruct((pre, rows, L), dtype),
        grid_spec=pltpu.PrefetchScalarGridSpec(
            num_scalar_prefetch=0,
            grid=grid,
            in_specs=[
                pl.BlockSpec((pre, None, tr, L), lambda r: (0, 0, r, 0)),   # a half
                pl.BlockSpec((pre, None, tr, L), lambda r: (0, 1, r, 0)),   # b half
            ],
            out_specs=pl.BlockSpec((pre, tr, L), lambda r: (0, r, 0)),
        ),
        compiler_params=_compiler_params(1),
        cost_estimate=_cost(pre * HP, isz),
    )(x4, x4)
    return out3.reshape(pre, HP)


# ----------------------------------------------------------------------------
# Path 3 (fallback): HP % 128 != 0.
# 4-D view (pre, 2, 1, HP) with the half selected by the index_map.  No
# wrapper-side slice/pad copies: every element crosses HBM exactly once each
# way.  Sublane occupancy is low but the kernel stays HBM-bound.
# ----------------------------------------------------------------------------
def _glu_fallback(x, pre: int, HP: int, dtype):
    isz = jnp.dtype(dtype).itemsize
    x4 = x.reshape(pre, 2, 1, HP)              # free contiguous reshape

    if HP * isz <= _FALLBACK_CHUNK_BYTES:
        tn = HP                                # full last dim: no 128-multiple needed
    else:
        tn = max(128, (_FALLBACK_CHUNK_BYTES // isz) // 128 * 128)
    n_j = pl.cdiv(HP, tn)
    # Sublane dim of these blocks is 1 -> VMEM pads each lane-tile to 4 KiB;
    # size the `pre`-batching by padded bytes (~32 B per lane element).
    bp = max(1, min(pre, (2 << 20) // (32 * max(tn, 128))))
    grid = (pl.cdiv(pre, bp), n_j)

    out3 = pl.pallas_call(
        _glu_kernel,
        out_shape=jax.ShapeDtypeStruct((pre, 1, HP), dtype),
        grid_spec=pltpu.PrefetchScalarGridSpec(
            num_scalar_prefetch=0,
            grid=grid,
            in_specs=[
                pl.BlockSpec((bp, None, 1, tn), lambda i, j: (i, 0, 0, j)),  # a half
                pl.BlockSpec((bp, None, 1, tn), lambda i, j: (i, 1, 0, j)),  # b half
            ],
            out_specs=pl.BlockSpec((bp, 1, tn), lambda i, j: (i, 0, j)),
        ),
        compiler_params=_compiler_params(2),
        cost_estimate=_cost(pre * HP, isz),
    )(x4, x4)
    return out3.reshape(pre, HP)


def glu_pallas(x: jax.Array, dim: int) -> jax.Array:
    """Pallas implementation of torch-style GLU: chunk x in 2 along `dim`,
    return a * sigmoid(b)."""
    dim = dim % x.ndim
    shape = x.shape
    C = shape[dim]
    assert C % 2 == 0, "split dimension must be even"
    half = C // 2

    pre = int(np.prod(shape[:dim], dtype=np.int64)) if dim > 0 else 1
    post = int(np.prod(shape[dim + 1:], dtype=np.int64)) if dim + 1 < x.ndim else 1
    out_shape_final = shape[:dim] + (half,) + shape[dim + 1:]

    HP = half * post                          # per-row extent of each half
    dtype = x.dtype
    sub = _sublane(dtype)

    if HP % 128 == 0 and pre >= sub:
        out2 = _glu_2d(x.reshape(pre, 2 * HP), pre, HP, dtype)
    elif HP % 128 == 0:
        out2 = _glu_4d_small_pre(x, pre, HP, dtype)
    else:
        out2 = _glu_fallback(x, pre, HP, dtype)

    return out2.reshape(out_shape_final)


def glu_reference(x: jax.Array, dim: int) -> jax.Array:
    a, b = jnp.split(x, 2, axis=dim)
    return a * jax.nn.sigmoid(b)


if __name__ == "__main__":
    key = jax.random.PRNGKey(0)

    # Primary test: NCHW input, GLU splits along the channel dim (dim=1).
    # pre=2 < 8 and HP=512 -> exercises the sublane-dense small-pre path.
    x = jax.random.normal(key, (2, 4, 16, 16), dtype=jnp.float32)
    out = jax.block_until_ready(glu_pallas(x, 1))
    ref = glu_reference(x, 1)
    np.testing.assert_allclose(np.asarray(out), np.asarray(ref), rtol=1e-6, atol=1e-6)
    assert out.shape == (2, 2, 16, 16)

    # Secondary test: split along the last axis -> 2-D offset-trick path.
    x2 = jax.random.normal(jax.random.PRNGKey(1), (2, 8, 256), dtype=jnp.float32)
    out2 = jax.block_until_ready(glu_pallas(x2, -1))
    np.testing.assert_allclose(
        np.asarray(out2), np.asarray(glu_reference(x2, -1)), rtol=1e-6, atol=1e-6)
    assert out2.shape == (2, 8, 128)

    # Tertiary test: awkward spatial size (HP=75) -> copy-free unaligned fallback.
    x3 = jax.random.normal(jax.random.PRNGKey(2), (2, 6, 5, 5), dtype=jnp.float32)
    out3 = jax.block_until_ready(glu_pallas(x3, 1))
    np.testing.assert_allclose(
        np.asarray(out3), np.asarray(glu_reference(x3, 1)), rtol=1e-6, atol=1e-6)
    assert out3.shape == (2, 3, 5, 5)

    print("KERNEL_OK")
</pallas_src>

<mosaic_0001>
module attributes {stable_mosaic.version = 11 : i64} {
  func.func @_glu_kernel(%arg0: i32, %arg1: memref<2x1x4x128xf32, #tpu.memory_space<vmem>>, %arg2: memref<2x1x4x128xf32, #tpu.memory_space<vmem>>, %arg3: memref<2x4x128xf32, #tpu.memory_space<vmem>>) attributes {dimension_semantics = [#tpu.dimension_semantics<parallel>], iteration_bounds = array<i64: 1>, scalar_prefetch = 0 : i64, scratch_operands = 0 : i64, tpu.core_type = #tpu.core_type<tc>, window_params = [{transform_indices = @transform_0, window_bounds = array<i64: 2, 1, 4, 128>}, {transform_indices = @transform_1, window_bounds = array<i64: 2, 1, 4, 128>}, {transform_indices = @transform_2, window_bounds = array<i64: 2, 4, 128>}]} {
    %c0 = arith.constant 0 : index
    %c0_0 = arith.constant 0 : index
    %c0_1 = arith.constant 0 : index
    %c0_2 = arith.constant 0 : index
    %0 = vector.load %arg1[%c0, %c0_0, %c0_1, %c0_2] : memref<2x1x4x128xf32, #tpu.memory_space<vmem>>, vector<2x1x4x128xf32>
    %1 = vector.shape_cast %0 : vector<2x1x4x128xf32> to vector<2x4x128xf32>
    %c0_3 = arith.constant 0 : index
    %c0_4 = arith.constant 0 : index
    %c0_5 = arith.constant 0 : index
    %c0_6 = arith.constant 0 : index
    %2 = vector.load %arg2[%c0_3, %c0_4, %c0_5, %c0_6] : memref<2x1x4x128xf32, #tpu.memory_space<vmem>>, vector<2x1x4x128xf32>
    %3 = vector.shape_cast %2 : vector<2x1x4x128xf32> to vector<2x4x128xf32>
    %4 = arith.negf %3 : vector<2x4x128xf32>
    %5 = math.exp %4 : vector<2x4x128xf32>
    %cst = arith.constant 1.000000e+00 : f32
    %6 = vector.broadcast %cst : f32 to vector<2x4x128xf32>
    %7 = arith.addf %6, %5 : vector<2x4x128xf32>
    %8 = arith.divf %6, %7 : vector<2x4x128xf32>
    %9 = arith.mulf %1, %8 : vector<2x4x128xf32>
    %c0_7 = arith.constant 0 : index
    %c0_8 = arith.constant 0 : index
    %c0_9 = arith.constant 0 : index
    %10 = vector.load %arg3[%c0_7, %c0_8, %c0_9] : memref<2x4x128xf32, #tpu.memory_space<vmem>>, vector<2x4x128xf32>
    tpu.vector_store %arg3[%c0_7, %c0_8, %c0_9], %9 {strides = array<i32>} : memref<2x4x128xf32, #tpu.memory_space<vmem>>, vector<2x4x128xf32>,
    return
  }
  func.func @transform_0(%arg0: i32) -> (i32, i32, i32, i32) {
    %c0_i32 = arith.constant 0 : i32
    %c0_i32_0 = arith.constant 0 : i32
    %c0_i32_1 = arith.constant 0 : i32
    %c0_i32_2 = arith.constant 0 : i32
    return %c0_i32, %c0_i32_0, %arg0, %c0_i32_1 : i32, i32, i32, i32
  }
  func.func @transform_1(%arg0: i32) -> (i32, i32, i32, i32) {
    %c0_i32 = arith.constant 0 : i32
    %c1_i32 = arith.constant 1 : i32
    %c0_i32_0 = arith.constant 0 : i32
    %c0_i32_1 = arith.constant 0 : i32
    return %c0_i32, %c1_i32, %arg0, %c0_i32_0 : i32, i32, i32, i32
  }
  func.func @transform_2(%arg0: i32) -> (i32, i32, i32) {
    %c0_i32 = arith.constant 0 : i32
    %c0_i32_0 = arith.constant 0 : i32
    %c0_i32_1 = arith.constant 0 : i32
    return %c0_i32, %arg0, %c0_i32_0 : i32, i32, i32
  }
}

</mosaic_0001>

<llo_original>
// kernel: tpu_custom_call.1
$region0: #{tpu_custom_call.1}
  #allocation0 [shape = 'u32[]', space=smem, size = 0x4, offset = 0x4, fixed_abs, tag = 'smem constant byte address 0x4 - core index']
  #allocation1 [shape = 'u32[144,128]{1,0:T(1,128)}', space=vmem, size = 0x12000, scoped, tag = 'internal scratch']
  %s0 = inlined_call_operand.hbm [shape: f32[2,2,4,128], index: 0, kind: input, shape index: {}]
  %s1 = inlined_call_operand.hbm [shape: f32[2,2,4,128], index: 1, kind: input, shape index: {}]
  %s2 = inlined_call_operand.hbm [shape: f32[2,4,128], index: 2, kind: output, shape index: {}]
  %s3 = sld [smem:[#allocation0]]
  $region26: #{tpu_custom_call.1} parent=0
    _
  %s5 = ssub.s32 1, %s3
  %s6 = scalar_select 0, %s5, %s3
  $region1: #{tpu_custom_call.1} parent=0
    #allocation2 [shape = 'u8[4096]{0}', space=vmem, size = 0x1000, scoped, tag = 'input window, operand 0, single buffered']
    #allocation3 [shape = 's32[1]{0}', space=sflag, size = 0x4, scoped, tag = 'scoped memory for tpu_custom_call.1']
    #allocation4 [shape = 's32[1]{0}', space=sflag, size = 0x4, scoped, tag = 'scoped memory for tpu_custom_call.1']
    #allocation5 [shape = 'u8[4096]{0}', space=vmem, size = 0x1000, scoped, tag = 'input window, operand 1, single buffered']
    #allocation6 [shape = 's32[1]{0}', space=sflag, size = 0x4, scoped, tag = 'scoped memory for tpu_custom_call.1']
    #allocation7 [shape = 'u8[4096]{0}', space=vmem, size = 0x1000, scoped, tag = 'output window, operand 0, single buffered']
    %7 = vsyncpa [#allocation3], 0
    %8 = vsyncpa [#allocation6], 0
    %9 = vsyncpa [#allocation4], 0
    // Predicated region
    $region2: #{tpu_custom_call.1} parent=1 // pred_check
      _
    $region3: #{tpu_custom_call.1} parent=1 // pred_check_branch
      %11 = sbr.rel (0) target = $region5
    $region4: #{tpu_custom_call.1} parent=1 // pred_region
      %s13 = ssub.s32 128, 128
      %14 = vsyncadd [#allocation3], %s13
      %s15 = sshll.u32 [#allocation2], 4
      %s16 = int_to_ptr.vmem [resolvable:$true] %s15
      %21 = dma.hbm_to_vmem [thread:$0]  %s0, 128, %s16, [#allocation3], 128, 64, 4
    $region5: #{tpu_custom_call.1} parent=1 // pred_fallthru
      _
    // Predicated region
    $region6: #{tpu_custom_call.1} parent=1 // pred_check
      _
    $region7: #{tpu_custom_call.1} parent=1 // pred_check_branch
      %23 = sbr.rel (0) target = $region9
    $region8: #{tpu_custom_call.1} parent=1 // pred_region
      %s25 = ssub.s32 128, 128
      %26 = vsyncadd [#allocation6], %s25
      %s27 = scalar_lea.hbm %s1, 64
      %s28 = sshll.u32 [#allocation5], 4
      %s29 = int_to_ptr.vmem [resolvable:$true] %s28
      %34 = dma.hbm_to_vmem [thread:$0]  %s27, 128, %s29, [#allocation6], 128, 64, 4
    $region9: #{tpu_custom_call.1} parent=1 // pred_fallthru
      _
    // Predicated region
    $region10: #{tpu_custom_call.1} parent=1 // pred_check
      _
    $region11: #{tpu_custom_call.1} parent=1 // pred_check_branch
      %36 = sbr.rel (0) target = $region13
    $region12: #{tpu_custom_call.1} parent=1 // pred_region
      %37 = dma.done [#allocation3], 128
    $region13: #{tpu_custom_call.1} parent=1 // pred_fallthru
      _
    // Predicated region
    $region14: #{tpu_custom_call.1} parent=1 // pred_check
      _
    $region15: #{tpu_custom_call.1} parent=1 // pred_check_branch
      %39 = sbr.rel (0) target = $region17
    $region16: #{tpu_custom_call.1} parent=1 // pred_region
      %40 = dma.done [#allocation6], 128
    $region17: #{tpu_custom_call.1} parent=1 // pred_fallthru
      _
    %v41 = vld [vmem:[#allocation2] sm:$0xf]
    %v42 = vld [vmem:[#allocation2 + $0x4] sm:$0xf]
    %v43 = vld [vmem:[#allocation5] sm:$0xf]
    %v44 = vld [vmem:[#allocation5 + $0x4] sm:$0xf]
    %v45 = vxor.u32 %v43, 2147483648
    %v46 = vxor.u32 %v44, 2147483648
    %v47 = vmul.f32 %v45, 1.442695
    %v48 = vpow.pop %v47
    %v49 = vmul.f32 %v46, 1.442695
    %v50 = vpow.pop %v49
    %v51 = vadd.f32 %v48, 1.0
    %v52 = vadd.f32 %v50, 1.0
    %v53 = vrcp.pop %v51
    %v54 = vmul.f32 1.0, %v53
    %v55 = vrcp.pop %v52
    %v56 = vmul.f32 1.0, %v55
    %v57 = vmul.f32 %v41, %v54
    %v58 = vmul.f32 %v42, %v56
    %59 = vst [vmem:[#allocation7] sm:$0xf] %v57
    %60 = vst [vmem:[#allocation7 + $0x4] sm:$0xf] %v58
    // Predicated region
    $region18: #{tpu_custom_call.1} parent=1 // pred_check
      _
    $region19: #{tpu_custom_call.1} parent=1 // pred_check_branch
      %62 = sbr.rel (0) target = $region21
    $region20: #{tpu_custom_call.1} parent=1 // pred_region
      %s64 = ssub.s32 128, 128
      %65 = vsyncadd [#allocation4], %s64
      %s66 = sshll.u32 [#allocation7], 4
      %s67 = int_to_ptr.vmem [resolvable:$true] %s66
      %72 = dma.vmem_to_hbm [thread:$0]  %s67, 128, %s2, [#allocation4], 64, 64, 4
    $region21: #{tpu_custom_call.1} parent=1 // pred_fallthru
      _
    // Predicated region
    $region22: #{tpu_custom_call.1} parent=1 // pred_check
      _
    $region23: #{tpu_custom_call.1} parent=1 // pred_check_branch
      %74 = sbr.rel (0) target = $region25
    $region24: #{tpu_custom_call.1} parent=1 // pred_region
      %75 = dma.done [#allocation4], 128
    $region25: #{tpu_custom_call.1} parent=1 // pred_fallthru
      _
    %76 = vsyncpa [#allocation3], 1
    %77 = vsyncpa [#allocation6], 1
    %78 = vsyncpa [#allocation4], 1

</llo_original>
